<compile_context>
chip_gen: v5e
topology: v5e:2x2
jax: 0.10.0
libtpu: 0.0.40
codegen_flags: <defaults>
</compile_context>

<pallas_src>
import functools

import jax
import jax.numpy as jnp
from jax import lax
from jax.experimental import pallas as pl
from jax.experimental.pallas import tpu as pltpu

# Packed row indices for the merged slab ([_SLAB_ROWS, W], rays/points -> lanes).
_RGB_R, _RGB_G, _RGB_B = 0, 1, 2
_GT_R, _GT_G, _GT_B = 3, 4, 5
_SDF, _OMASK, _NMASK = 6, 7, 8
_GX, _GY, _GZ = 9, 10, 11
_SLAB_ROWS = 12

# Rows of the VMEM vector accumulator.
_A_RGB, _A_KRGB, _A_BCE, _A_KMSK, _A_EIK = 0, 1, 2, 3, 4
_ACC_ROWS = 8  # padded to a full f32 sublane tile


def _idr_loss_kernel(slab_ref, out_ref, acc_ref, *, alpha, eikonal_weight,
                     mask_weight, n_rays, m_pts, tile):
    i = pl.program_id(0)

    @pl.when(i == 0)
    def _init():
        acc_ref[...] = jnp.zeros_like(acc_ref)

    # Column validity recomputed in-kernel (rays live on the 128-lane axis).
    col = i * tile + lax.broadcasted_iota(jnp.int32, (1, tile), 1)   # (1, T)
    ray_valid = (col < n_rays).astype(jnp.float32)
    grd_valid = (col < m_pts).astype(jnp.float32)

    # ---- per-ray data (static sublane slices of the single slab) -----------
    sdf = slab_ref[_SDF:_SDF + 1, :]
    om = slab_ref[_OMASK:_OMASK + 1, :]
    nm = slab_ref[_NMASK:_NMASK + 1, :]

    both = nm * om                                   # padded cols are already 0
    not_both = (1.0 - both) * ray_valid              # ~(net_mask & obj_mask)

    # masked L1 between rgb and gt, summed over the 3 channels (pure VPU)
    d0 = jnp.abs(slab_ref[_RGB_R:_RGB_R + 1, :] - slab_ref[_GT_R:_GT_R + 1, :])
    d1 = jnp.abs(slab_ref[_RGB_G:_RGB_G + 1, :] - slab_ref[_GT_G:_GT_G + 1, :])
    d2 = jnp.abs(slab_ref[_RGB_B:_RGB_B + 1, :] - slab_ref[_GT_B:_GT_B + 1, :])
    l1 = (d0 + d1 + d2) * both

    # stable BCE-with-logits(x = -alpha*sdf, target = object_mask), 'sum'
    x = (-alpha) * sdf
    bce = jnp.maximum(x, 0.0) - x * om + jnp.log(1.0 + jnp.exp(-jnp.abs(x)))
    bce_m = bce * not_both

    # ---- eikonal: (||g||_2 - 1)^2 via sublane slices (pure VPU + EUP) ------
    gx = slab_ref[_GX:_GX + 1, :]
    gy = slab_ref[_GY:_GY + 1, :]
    gz = slab_ref[_GZ:_GZ + 1, :]
    nrm = jnp.sqrt(gx * gx + gy * gy + gz * gz)
    eik = ((nrm - 1.0) ** 2) * grd_valid

    # ---- per-lane partial sums in VMEM (no XLU, no SMEM RMW per step) ------
    acc_ref[_A_RGB:_A_RGB + 1, :] += l1
    acc_ref[_A_KRGB:_A_KRGB + 1, :] += both
    acc_ref[_A_BCE:_A_BCE + 1, :] += bce_m
    acc_ref[_A_KMSK:_A_KMSK + 1, :] += not_both
    acc_ref[_A_EIK:_A_EIK + 1, :] += eik

    @pl.when(i == pl.num_programs(0) - 1)
    def _finalize():
        rgb_sum = jnp.sum(acc_ref[_A_RGB, :])
        k_rgb = jnp.sum(acc_ref[_A_KRGB, :])
        bce_sum = jnp.sum(acc_ref[_A_BCE, :])
        k_msk = jnp.sum(acc_ref[_A_KMSK, :])
        eik_sum = jnp.sum(acc_ref[_A_EIK, :])

        inv_n = 1.0 / float(n_rays)
        # L1Loss(reduction='mean') over the (K, 3) masked rows, then / N.
        rgb_loss = jnp.where(
            k_rgb > 0.0,
            rgb_sum / jnp.maximum(3.0 * k_rgb, 1.0) * inv_n,
            jnp.float32(0.0))
        mask_loss = jnp.where(
            k_msk > 0.0,
            bce_sum * (1.0 / alpha) * inv_n,
            jnp.float32(0.0))
        eik_loss = eik_sum * (1.0 / float(max(m_pts, 1)))

        out_ref[0] = rgb_loss + eikonal_weight * eik_loss + mask_weight * mask_loss
        out_ref[1] = rgb_loss
        out_ref[2] = eik_loss
        out_ref[3] = mask_loss


def idr_loss1(rgb_values, rgb_gt, sdf_output, network_object_mask, object_mask,
              grad_theta, *, eikonal_weight, mask_weight, alpha, tile=32768):
    """Pallas implementation of IDRLoss1.forward (loss_type='L1')."""
    assert tile % 128 == 0
    n = object_mask.shape[0]
    m = 0 if grad_theta is None else grad_theta.shape[0]

    # Clamp the lane tile down for tiny inputs (keep it a multiple of 128).
    needed = max(n, m, 1)
    tile = min(tile, pl.cdiv(needed, 128) * 128)
    num_tiles = max(pl.cdiv(n, tile), pl.cdiv(max(m, 1), tile), 1)
    w = num_tiles * tile

    # --- host-side repack: one lane-dense (12, W) f32 slab -------------------
    rgb = rgb_values.reshape(n, 3).astype(jnp.float32)
    gt = rgb_gt.reshape(-1, 3).astype(jnp.float32)
    sdf = sdf_output.reshape(n).astype(jnp.float32)
    om = object_mask.reshape(n).astype(jnp.float32)
    nm = network_object_mask.reshape(n).astype(jnp.float32)

    ray_rows = jnp.concatenate(
        [rgb.T, gt.T, sdf[None, :], om[None, :], nm[None, :]], axis=0)   # (9, n)
    if m > 0:
        grad_rows = grad_theta.reshape(m, 3).astype(jnp.float32).T       # (3, m)
    else:
        grad_rows = jnp.zeros((3, 0), jnp.float32)

    slab = jnp.concatenate(
        [jnp.pad(ray_rows, ((0, 0), (0, w - n))),
         jnp.pad(grad_rows, ((0, 0), (0, w - m)))], axis=0)              # (12, w)

    kernel = functools.partial(
        _idr_loss_kernel,
        alpha=float(alpha),
        eikonal_weight=float(eikonal_weight),
        mask_weight=float(mask_weight),
        n_rays=n,
        m_pts=m,
        tile=tile,
    )

    bytes_accessed = 4 * slab.size + 4 * 4
    out = pl.pallas_call(
        kernel,
        out_shape=jax.ShapeDtypeStruct((4,), jnp.float32),
        grid_spec=pltpu.PrefetchScalarGridSpec(
            num_scalar_prefetch=0,
            grid=(num_tiles,),
            in_specs=[
                pl.BlockSpec((_SLAB_ROWS, tile), lambda i: (0, i)),
            ],
            out_specs=pl.BlockSpec(memory_space=pltpu.MemorySpace.SMEM),
            scratch_shapes=[pltpu.VMEM((_ACC_ROWS, tile), jnp.float32)],
        ),
        compiler_params=pltpu.CompilerParams(
            dimension_semantics=("arbitrary",)),
        cost_estimate=pl.CostEstimate(
            flops=40 * w, transcendentals=3 * w,
            bytes_accessed=int(bytes_accessed)),
    )(slab)

    # TODO(synk): on v7x, add a leading CORE_PARALLEL grid axis of size 2 with
    # per-core accumulators and a (2, 4) partial-loss output summed here.
    return {
        "loss": out[0],
        "idr_rgb_loss": out[1],
        "eikonal_loss": out[2],
        "mask_loss": out[3],
    }


if __name__ == "__main__":
    import numpy as np

    key = jax.random.PRNGKey(0)
    k0, k1, k2, k3, k4, k5 = jax.random.split(key, 6)

    N = 128   # number of rays (object_mask.shape[0])
    M = 64    # number of eikonal sample points
    EIK_W, MASK_W, ALPHA = 0.1, 100.0, 50.0

    rgb_values = jax.random.uniform(k0, (N, 3), dtype=jnp.float32)
    rgb_gt = jax.random.uniform(k1, (1, N, 3), dtype=jnp.float32)  # like GT['rgb']
    sdf_output = jax.random.normal(k2, (N, 1), dtype=jnp.float32)
    network_object_mask = jax.random.bernoulli(k3, 0.6, (N,))
    object_mask = jax.random.bernoulli(k4, 0.6, (N,))
    grad_theta = jax.random.normal(k5, (M, 3), dtype=jnp.float32)

    losses = idr_loss1(
        rgb_values, rgb_gt, sdf_output, network_object_mask, object_mask,
        grad_theta,
        eikonal_weight=EIK_W, mask_weight=MASK_W, alpha=ALPHA)
    jax.block_until_ready(losses["loss"])

    # ---- pure-JAX reference (mirrors the PyTorch module) -------------------
    both = (network_object_mask & object_mask).astype(jnp.float32)[:, None]
    not_both = 1.0 - both
    diff = jnp.abs(rgb_values - rgb_gt.reshape(-1, 3))
    k = jnp.sum(both)
    ref_rgb = jnp.where(k > 0, jnp.sum(diff * both) / jnp.maximum(3.0 * k, 1.0) / N, 0.0)
    x = -ALPHA * sdf_output.reshape(-1)
    gt_t = object_mask.astype(jnp.float32)
    bce = jnp.maximum(x, 0.0) - x * gt_t + jnp.log1p(jnp.exp(-jnp.abs(x)))
    km = jnp.sum(not_both)
    ref_mask = jnp.where(km > 0, jnp.sum(bce * not_both[:, 0]) / ALPHA / N, 0.0)
    nrm = jnp.sqrt(jnp.sum(grad_theta * grad_theta, axis=1))
    ref_eik = jnp.mean((nrm - 1.0) ** 2)
    ref_total = ref_rgb + EIK_W * ref_eik + MASK_W * ref_mask

    np.testing.assert_allclose(float(losses["idr_rgb_loss"]), float(ref_rgb), rtol=1e-3, atol=1e-6)
    np.testing.assert_allclose(float(losses["eikonal_loss"]), float(ref_eik), rtol=1e-3, atol=1e-6)
    np.testing.assert_allclose(float(losses["mask_loss"]), float(ref_mask), rtol=1e-3, atol=1e-6)
    np.testing.assert_allclose(float(losses["loss"]), float(ref_total), rtol=1e-3, atol=1e-6)

    print("KERNEL_OK")
</pallas_src>

<mosaic_0001>
module attributes {stable_mosaic.version = 11 : i64} {
  func.func @_idr_loss_kernel(%arg0: i32, %arg1: memref<12x128xf32, #tpu.memory_space<vmem>>, %arg2: memref<4xf32, #tpu.memory_space<smem>>, %arg3: memref<8x128xf32, #tpu.memory_space<vmem>>) attributes {dimension_semantics = [#tpu.dimension_semantics<arbitrary>], iteration_bounds = array<i64: 1>, scalar_prefetch = 0 : i64, scratch_operands = 1 : i64, tpu.core_type = #tpu.core_type<tc>, window_params = [{transform_indices = @transform_0, window_bounds = array<i64: 12, 128>}, {transform_indices = @transform_1, window_bounds = array<i64: 4>}]} {
    %c0_i32 = arith.constant 0 : i32
    %0 = arith.cmpi eq, %arg0, %c0_i32 : i32
    %1 = arith.extui %0 : i1 to i32
    %c0_i32_0 = arith.constant 0 : i32
    %2 = arith.cmpi ne, %1, %c0_i32_0 : i32
    scf.if %2 {
      %cst_41 = arith.constant 0.000000e+00 : f32
      %83 = vector.broadcast %cst_41 : f32 to vector<8x128xf32>
      %c0_42 = arith.constant 0 : index
      %c0_43 = arith.constant 0 : index
      %84 = vector.load %arg3[%c0_42, %c0_43] : memref<8x128xf32, #tpu.memory_space<vmem>>, vector<8x128xf32>
      tpu.vector_store %arg3[%c0_42, %c0_43], %83 {strides = array<i32>} : memref<8x128xf32, #tpu.memory_space<vmem>>, vector<8x128xf32>,
    } else {
    }
    %c128_i32 = arith.constant 128 : i32
    %3 = arith.muli %arg0, %c128_i32 : i32
    %4 = tpu.iota {dimensions = array<i32: 1>} : vector<1x128xi32>
    %5 = vector.broadcast %3 : i32 to vector<1x128xi32>
    %6 = arith.addi %5, %4 : vector<1x128xi32>
    %c128_i32_1 = arith.constant 128 : i32
    %7 = vector.broadcast %c128_i32_1 : i32 to vector<1x128xi32>
    %8 = arith.cmpi slt, %6, %7 : vector<1x128xi32>
    %9 = arith.extui %8 : vector<1x128xi1> to vector<1x128xi32>
    %10 = arith.sitofp %9 : vector<1x128xi32> to vector<1x128xf32>
    %c64_i32 = arith.constant 64 : i32
    %11 = vector.broadcast %c64_i32 : i32 to vector<1x128xi32>
    %12 = arith.cmpi slt, %6, %11 : vector<1x128xi32>
    %13 = arith.extui %12 : vector<1x128xi1> to vector<1x128xi32>
    %14 = arith.sitofp %13 : vector<1x128xi32> to vector<1x128xf32>
    %c6 = arith.constant 6 : index
    %c0 = arith.constant 0 : index
    %15 = vector.load %arg1[%c6, %c0] : memref<12x128xf32, #tpu.memory_space<vmem>>, vector<1x128xf32>
    %c7 = arith.constant 7 : index
    %c0_2 = arith.constant 0 : index
    %16 = vector.load %arg1[%c7, %c0_2] : memref<12x128xf32, #tpu.memory_space<vmem>>, vector<1x128xf32>
    %c8 = arith.constant 8 : index
    %c0_3 = arith.constant 0 : index
    %17 = vector.load %arg1[%c8, %c0_3] : memref<12x128xf32, #tpu.memory_space<vmem>>, vector<1x128xf32>
    %18 = arith.mulf %17, %16 : vector<1x128xf32>
    %cst = arith.constant 1.000000e+00 : f32
    %19 = vector.broadcast %cst : f32 to vector<1x128xf32>
    %20 = arith.subf %19, %18 : vector<1x128xf32>
    %21 = arith.mulf %20, %10 : vector<1x128xf32>
    %c0_4 = arith.constant 0 : index
    %c0_5 = arith.constant 0 : index
    %22 = vector.load %arg1[%c0_4, %c0_5] : memref<12x128xf32, #tpu.memory_space<vmem>>, vector<1x128xf32>
    %c3 = arith.constant 3 : index
    %c0_6 = arith.constant 0 : index
    %23 = vector.load %arg1[%c3, %c0_6] : memref<12x128xf32, #tpu.memory_space<vmem>>, vector<1x128xf32>
    %24 = arith.subf %22, %23 : vector<1x128xf32>
    %25 = math.absf %24 : vector<1x128xf32>
    %c1 = arith.constant 1 : index
    %c0_7 = arith.constant 0 : index
    %26 = vector.load %arg1[%c1, %c0_7] : memref<12x128xf32, #tpu.memory_space<vmem>>, vector<1x128xf32>
    %c4 = arith.constant 4 : index
    %c0_8 = arith.constant 0 : index
    %27 = vector.load %arg1[%c4, %c0_8] : memref<12x128xf32, #tpu.memory_space<vmem>>, vector<1x128xf32>
    %28 = arith.subf %26, %27 : vector<1x128xf32>
    %29 = math.absf %28 : vector<1x128xf32>
    %c2 = arith.constant 2 : index
    %c0_9 = arith.constant 0 : index
    %30 = vector.load %arg1[%c2, %c0_9] : memref<12x128xf32, #tpu.memory_space<vmem>>, vector<1x128xf32>
    %c5 = arith.constant 5 : index
    %c0_10 = arith.constant 0 : index
    %31 = vector.load %arg1[%c5, %c0_10] : memref<12x128xf32, #tpu.memory_space<vmem>>, vector<1x128xf32>
    %32 = arith.subf %30, %31 : vector<1x128xf32>
    %33 = math.absf %32 : vector<1x128xf32>
    %34 = arith.addf %25, %29 : vector<1x128xf32>
    %35 = arith.addf %34, %33 : vector<1x128xf32>
    %36 = arith.mulf %35, %18 : vector<1x128xf32>
    %cst_11 = arith.constant -5.000000e+01 : f32
    %37 = vector.broadcast %cst_11 : f32 to vector<1x128xf32>
    %38 = arith.mulf %37, %15 : vector<1x128xf32>
    %cst_12 = arith.constant 0.000000e+00 : f32
    %39 = vector.broadcast %cst_12 : f32 to vector<1x128xf32>
    %40 = arith.maximumf %38, %39 : vector<1x128xf32>
    %41 = arith.mulf %38, %16 : vector<1x128xf32>
    %42 = arith.subf %40, %41 : vector<1x128xf32>
    %43 = math.absf %38 : vector<1x128xf32>
    %cst_13 = arith.constant 0.000000e+00 : f32
    %44 = vector.broadcast %cst_13 : f32 to vector<1x128xf32>
    %45 = arith.subf %44, %43 : vector<1x128xf32>
    %46 = math.exp %45 : vector<1x128xf32>
    %cst_14 = arith.constant 1.000000e+00 : f32
    %47 = vector.broadcast %cst_14 : f32 to vector<1x128xf32>
    %48 = arith.addf %47, %46 : vector<1x128xf32>
    %49 = math.log %48 : vector<1x128xf32>
    %50 = arith.addf %42, %49 : vector<1x128xf32>
    %51 = arith.mulf %50, %21 : vector<1x128xf32>
    %c9 = arith.constant 9 : index
    %c0_15 = arith.constant 0 : index
    %52 = vector.load %arg1[%c9, %c0_15] : memref<12x128xf32, #tpu.memory_space<vmem>>, vector<1x128xf32>
    %c10 = arith.constant 10 : index
    %c0_16 = arith.constant 0 : index
    %53 = vector.load %arg1[%c10, %c0_16] : memref<12x128xf32, #tpu.memory_space<vmem>>, vector<1x128xf32>
    %c11 = arith.constant 11 : index
    %c0_17 = arith.constant 0 : index
    %54 = vector.load %arg1[%c11, %c0_17] : memref<12x128xf32, #tpu.memory_space<vmem>>, vector<1x128xf32>
    %55 = arith.mulf %52, %52 : vector<1x128xf32>
    %56 = arith.mulf %53, %53 : vector<1x128xf32>
    %57 = arith.addf %55, %56 : vector<1x128xf32>
    %58 = arith.mulf %54, %54 : vector<1x128xf32>
    %59 = arith.addf %57, %58 : vector<1x128xf32>
    %60 = math.sqrt %59 : vector<1x128xf32>
    %cst_18 = arith.constant 1.000000e+00 : f32
    %61 = vector.broadcast %cst_18 : f32 to vector<1x128xf32>
    %62 = arith.subf %60, %61 : vector<1x128xf32>
    %63 = arith.mulf %62, %62 : vector<1x128xf32>
    %64 = arith.mulf %63, %14 : vector<1x128xf32>
    %c0_19 = arith.constant 0 : index
    %c0_20 = arith.constant 0 : index
    %65 = vector.load %arg3[%c0_19, %c0_20] : memref<8x128xf32, #tpu.memory_space<vmem>>, vector<1x128xf32>
    %66 = arith.addf %65, %36 : vector<1x128xf32>
    %c0_21 = arith.constant 0 : index
    %c0_22 = arith.constant 0 : index
    %67 = vector.load %arg3[%c0_21, %c0_22] : memref<8x128xf32, #tpu.memory_space<vmem>>, vector<1x128xf32>
    tpu.vector_store %arg3[%c0_21, %c0_22], %66 {strides = array<i32>} : memref<8x128xf32, #tpu.memory_space<vmem>>, vector<1x128xf32>,
    %c1_23 = arith.constant 1 : index
    %c0_24 = arith.constant 0 : index
    %68 = vector.load %arg3[%c1_23, %c0_24] : memref<8x128xf32, #tpu.memory_space<vmem>>, vector<1x128xf32>
    %69 = arith.addf %68, %18 : vector<1x128xf32>
    %c1_25 = arith.constant 1 : index
    %c0_26 = arith.constant 0 : index
    %70 = vector.load %arg3[%c1_25, %c0_26] : memref<8x128xf32, #tpu.memory_space<vmem>>, vector<1x128xf32>
    tpu.vector_store %arg3[%c1_25, %c0_26], %69 {strides = array<i32>} : memref<8x128xf32, #tpu.memory_space<vmem>>, vector<1x128xf32>,
    %c2_27 = arith.constant 2 : index
    %c0_28 = arith.constant 0 : index
    %71 = vector.load %arg3[%c2_27, %c0_28] : memref<8x128xf32, #tpu.memory_space<vmem>>, vector<1x128xf32>
    %72 = arith.addf %71, %51 : vector<1x128xf32>
    %c2_29 = arith.constant 2 : index
    %c0_30 = arith.constant 0 : index
    %73 = vector.load %arg3[%c2_29, %c0_30] : memref<8x128xf32, #tpu.memory_space<vmem>>, vector<1x128xf32>
    tpu.vector_store %arg3[%c2_29, %c0_30], %72 {strides = array<i32>} : memref<8x128xf32, #tpu.memory_space<vmem>>, vector<1x128xf32>,
    %c3_31 = arith.constant 3 : index
    %c0_32 = arith.constant 0 : index
    %74 = vector.load %arg3[%c3_31, %c0_32] : memref<8x128xf32, #tpu.memory_space<vmem>>, vector<1x128xf32>
    %75 = arith.addf %74, %21 : vector<1x128xf32>
    %c3_33 = arith.constant 3 : index
    %c0_34 = arith.constant 0 : index
    %76 = vector.load %arg3[%c3_33, %c0_34] : memref<8x128xf32, #tpu.memory_space<vmem>>, vector<1x128xf32>
    tpu.vector_store %arg3[%c3_33, %c0_34], %75 {strides = array<i32>} : memref<8x128xf32, #tpu.memory_space<vmem>>, vector<1x128xf32>,
    %c4_35 = arith.constant 4 : index
    %c0_36 = arith.constant 0 : index
    %77 = vector.load %arg3[%c4_35, %c0_36] : memref<8x128xf32, #tpu.memory_space<vmem>>, vector<1x128xf32>
    %78 = arith.addf %77, %64 : vector<1x128xf32>
    %c4_37 = arith.constant 4 : index
    %c0_38 = arith.constant 0 : index
    %79 = vector.load %arg3[%c4_37, %c0_38] : memref<8x128xf32, #tpu.memory_space<vmem>>, vector<1x128xf32>
    tpu.vector_store %arg3[%c4_37, %c0_38], %78 {strides = array<i32>} : memref<8x128xf32, #tpu.memory_space<vmem>>, vector<1x128xf32>,
    %c0_i32_39 = arith.constant 0 : i32
    %80 = arith.cmpi eq, %arg0, %c0_i32_39 : i32
    %81 = arith.extui %80 : i1 to i32
    %c0_i32_40 = arith.constant 0 : i32
    %82 = arith.cmpi ne, %81, %c0_i32_40 : i32
    scf.if %82 {
      %c0_41 = arith.constant 0 : index
      %c0_42 = arith.constant 0 : index
      %83 = vector.load %arg3[%c0_41, %c0_42] : memref<8x128xf32, #tpu.memory_space<vmem>>, vector<1x128xf32>
      %84 = vector.shape_cast %83 : vector<1x128xf32> to vector<128xf32>
      %85 = vector.shape_cast %84 : vector<128xf32> to vector<1x128xf32>
      %cst_43 = arith.constant dense<0.000000e+00> : vector<1xf32>
      %86 = vector.multi_reduction <add>, %85, %cst_43 [1] : vector<1x128xf32> to vector<1xf32>
      %87 = vector.shape_cast %86 : vector<1xf32> to vector<1x1xf32>
      %88 = vector.extract %87[0, 0] : f32 from vector<1x1xf32>
      %c1_44 = arith.constant 1 : index
      %c0_45 = arith.constant 0 : index
      %89 = vector.load %arg3[%c1_44, %c0_45] : memref<8x128xf32, #tpu.memory_space<vmem>>, vector<1x128xf32>
      %90 = vector.shape_cast %89 : vector<1x128xf32> to vector<128xf32>
      %91 = vector.shape_cast %90 : vector<128xf32> to vector<1x128xf32>
      %cst_46 = arith.constant dense<0.000000e+00> : vector<1xf32>
      %92 = vector.multi_reduction <add>, %91, %cst_46 [1] : vector<1x128xf32> to vector<1xf32>
      %93 = vector.shape_cast %92 : vector<1xf32> to vector<1x1xf32>
      %94 = vector.extract %93[0, 0] : f32 from vector<1x1xf32>
      %c2_47 = arith.constant 2 : index
      %c0_48 = arith.constant 0 : index
      %95 = vector.load %arg3[%c2_47, %c0_48] : memref<8x128xf32, #tpu.memory_space<vmem>>, vector<1x128xf32>
      %96 = vector.shape_cast %95 : vector<1x128xf32> to vector<128xf32>
      %97 = vector.shape_cast %96 : vector<128xf32> to vector<1x128xf32>
      %cst_49 = arith.constant dense<0.000000e+00> : vector<1xf32>
      %98 = vector.multi_reduction <add>, %97, %cst_49 [1] : vector<1x128xf32> to vector<1xf32>
      %99 = vector.shape_cast %98 : vector<1xf32> to vector<1x1xf32>
      %100 = vector.extract %99[0, 0] : f32 from vector<1x1xf32>
      %c3_50 = arith.constant 3 : index
      %c0_51 = arith.constant 0 : index
      %101 = vector.load %arg3[%c3_50, %c0_51] : memref<8x128xf32, #tpu.memory_space<vmem>>, vector<1x128xf32>
      %102 = vector.shape_cast %101 : vector<1x128xf32> to vector<128xf32>
      %103 = vector.shape_cast %102 : vector<128xf32> to vector<1x128xf32>
      %cst_52 = arith.constant dense<0.000000e+00> : vector<1xf32>
      %104 = vector.multi_reduction <add>, %103, %cst_52 [1] : vector<1x128xf32> to vector<1xf32>
      %105 = vector.shape_cast %104 : vector<1xf32> to vector<1x1xf32>
      %106 = vector.extract %105[0, 0] : f32 from vector<1x1xf32>
      %c4_53 = arith.constant 4 : index
      %c0_54 = arith.constant 0 : index
      %107 = vector.load %arg3[%c4_53, %c0_54] : memref<8x128xf32, #tpu.memory_space<vmem>>, vector<1x128xf32>
      %108 = vector.shape_cast %107 : vector<1x128xf32> to vector<128xf32>
      %109 = vector.shape_cast %108 : vector<128xf32> to vector<1x128xf32>
      %cst_55 = arith.constant dense<0.000000e+00> : vector<1xf32>
      %110 = vector.multi_reduction <add>, %109, %cst_55 [1] : vector<1x128xf32> to vector<1xf32>
      %111 = vector.shape_cast %110 : vector<1xf32> to vector<1x1xf32>
      %112 = vector.extract %111[0, 0] : f32 from vector<1x1xf32>
      %cst_56 = arith.constant 0.000000e+00 : f32
      %113 = arith.cmpf ogt, %94, %cst_56 : f32
      %cst_57 = arith.constant 3.000000e+00 : f32
      %114 = arith.mulf %cst_57, %94 : f32
      %cst_58 = arith.constant 1.000000e+00 : f32
      %115 = arith.maximumf %114, %cst_58 : f32
      %116 = arith.divf %88, %115 : f32
      %cst_59 = arith.constant 7.812500e-03 : f32
      %117 = arith.mulf %116, %cst_59 : f32
      %cst_60 = arith.constant 0.000000e+00 : f32
      %118 = arith.select %113, %117, %cst_60 : f32
      %cst_61 = arith.constant 0.000000e+00 : f32
      %119 = arith.cmpf ogt, %106, %cst_61 : f32
      %cst_62 = arith.constant 2.000000e-02 : f32
      %120 = arith.mulf %100, %cst_62 : f32
      %cst_63 = arith.constant 7.812500e-03 : f32
      %121 = arith.mulf %120, %cst_63 : f32
      %cst_64 = arith.constant 0.000000e+00 : f32
      %122 = arith.select %119, %121, %cst_64 : f32
      %cst_65 = arith.constant 1.562500e-02 : f32
      %123 = arith.mulf %112, %cst_65 : f32
      %cst_66 = arith.constant 1.000000e-01 : f32
      %124 = arith.mulf %cst_66, %123 : f32
      %125 = arith.addf %118, %124 : f32
      %cst_67 = arith.constant 1.000000e+02 : f32
      %126 = arith.mulf %cst_67, %122 : f32
      %127 = arith.addf %125, %126 : f32
      %c0_68 = arith.constant 0 : index
      %128 = memref.load %arg2[%c0_68] : memref<4xf32, #tpu.memory_space<smem>>
      memref.store %127, %arg2[%c0_68] : memref<4xf32, #tpu.memory_space<smem>>
      %c1_69 = arith.constant 1 : index
      %129 = memref.load %arg2[%c1_69] : memref<4xf32, #tpu.memory_space<smem>>
      memref.store %118, %arg2[%c1_69] : memref<4xf32, #tpu.memory_space<smem>>
      %c2_70 = arith.constant 2 : index
      %130 = memref.load %arg2[%c2_70] : memref<4xf32, #tpu.memory_space<smem>>
      memref.store %123, %arg2[%c2_70] : memref<4xf32, #tpu.memory_space<smem>>
      %c3_71 = arith.constant 3 : index
      %131 = memref.load %arg2[%c3_71] : memref<4xf32, #tpu.memory_space<smem>>
      memref.store %122, %arg2[%c3_71] : memref<4xf32, #tpu.memory_space<smem>>
    } else {
    }
    return
  }
  func.func @transform_0(%arg0: i32) -> (i32, i32) {
    %c0_i32 = arith.constant 0 : i32
    %c0_i32_0 = arith.constant 0 : i32
    return %c0_i32, %arg0 : i32, i32
  }
  func.func @transform_1(%arg0: i32) -> i32 {
    %c0_i32 = arith.constant 0 : i32
    %c0_i32_0 = arith.constant 0 : i32
    return %c0_i32 : i32
  }
}

</mosaic_0001>

<llo_original>
// kernel: tpu_custom_call.1
$region0: #{tpu_custom_call.1}
  #allocation0 [shape = 'u32[]', space=smem, size = 0x4, offset = 0x4, fixed_abs, tag = 'smem constant byte address 0x4 - core index']
  #allocation1 [shape = 'u32[72,128]{1,0:T(1,128)}', space=vmem, size = 0x9000, scoped, tag = 'internal scratch']
  #allocation2 [shape = 'f32[8,128]{1,0:T(8,128)}', space=vmem, size = 0x1000, scoped, tag = 'scratch operand']
  %s0 = inlined_call_operand.hbm [shape: f32[12,128], index: 0, kind: input, shape index: {}]
  %s1 = inlined_call_operand.hbm [shape: f32[4], index: 1, kind: output, shape index: {}]
  %s2 = sld [smem:[#allocation0]]
  $region26: #{tpu_custom_call.1} parent=0
    _
  %s4 = ssub.s32 1, %s2
  %s5 = scalar_select 0, %s4, %s2
  $region1: #{tpu_custom_call.1} parent=0
    #allocation3 [shape = 'u8[8192]{0}', space=vmem, size = 0x2000, scoped, tag = 'input window, operand 0, single buffered']
    #allocation4 [shape = 's32[1]{0}', space=sflag, size = 0x4, scoped, tag = 'scoped memory for tpu_custom_call.1']
    #allocation5 [shape = 's32[1]{0}', space=sflag, size = 0x4, scoped, tag = 'scoped memory for tpu_custom_call.1']
    #allocation6 [shape = 'u8[512]{0}', space=smem, size = 0x200, scoped, tag = 'output window, operand 0, single buffered']
    %6 = vsyncpa [#allocation4], 0
    %7 = vsyncpa [#allocation5], 0
    // Predicated region
    $region2: #{tpu_custom_call.1} parent=1 // pred_check
      _
    $region3: #{tpu_custom_call.1} parent=1 // pred_check_branch
      %9 = sbr.rel (0) target = $region5
    $region4: #{tpu_custom_call.1} parent=1 // pred_region
      %11 = vsyncadd [#allocation4], 0
      %s12 = sshll.u32 %s0, 4
      %s13 = int_to_ptr.hbm [resolvable:$true] %s12
      %s14 = sshll.u32 [#allocation3], 4
      %s15 = int_to_ptr.vmem [resolvable:$true] %s14
      %20 = dma.hbm_to_vmem [thread:$0]  %s13, 256, %s15, [#allocation4], 128, 128, 8
    $region5: #{tpu_custom_call.1} parent=1 // pred_fallthru
      _
    // Predicated region
    $region6: #{tpu_custom_call.1} parent=1 // pred_check
      _
    $region7: #{tpu_custom_call.1} parent=1 // pred_check_branch
      %22 = sbr.rel (0) target = $region9
    $region8: #{tpu_custom_call.1} parent=1 // pred_region
      %24 = dma.done [#allocation4], 256
    $region9: #{tpu_custom_call.1} parent=1 // pred_fallthru
      _
    %p25 = scmp.eq.s32.totalorder 0, 0
    // Predicated region
    $region10: #{tpu_custom_call.1} parent=1 // pred_check
      %p26 = pneg %p25
    $region11: #{tpu_custom_call.1} parent=1 // pred_check_branch
      %28 = sbr.rel (%p26) target = $region13
    $region12: #{tpu_custom_call.1} parent=1 // pred_region
      %29 = vst [vmem:[#allocation2] sm:$0xff] 0.0
    $region13: #{tpu_custom_call.1} parent=1 // pred_fallthru
      _
    %s30 = smul.u32 0, 128
    %v31 = vlaneseq
    %v32 = vand.u32 %v31, 127
    %v33 = vstv %s30
    %v34 = vadd.s32 %v33, %v32
    %vm35 = vcmp.lt.s32.totalorder %v34, 128
    %v36 = vsel %vm35, 1, 0
    %v37 = vcvt.s32.f32 %v36
    %vm38 = vcmp.lt.s32.totalorder %v34, 64
    %v39 = vsel %vm38, 1, 0
    %v40 = vcvt.s32.f32 %v39
    %v41 = vld [vmem:[#allocation3 + $0x6] sm:$0x1]
    %v42 = vld [vmem:[#allocation3 + $0x7] sm:$0x1]
    %v43 = vld [vmem:[#allocation3 + $0x8] sm:$0x1]
    %v44 = vmul.f32 %v43, %v42
    %v45 = vsub.f32 1.0, %v44
    %v46 = vmul.f32 %v45, %v37
    %v47 = vld [vmem:[#allocation3] sm:$0x1]
    %v48 = vld [vmem:[#allocation3 + $0x3] sm:$0x1]
    %v49 = vsub.f32 %v47, %v48
    %v50 = vand.u32 2147483647, %v49
    %v51 = vld [vmem:[#allocation3 + $0x1] sm:$0x1]
    %v52 = vld [vmem:[#allocation3 + $0x4] sm:$0x1]
    %v53 = vsub.f32 %v51, %v52
    %v54 = vand.u32 2147483647, %v53
    %v55 = vld [vmem:[#allocation3 + $0x2] sm:$0x1]
    %v56 = vld [vmem:[#allocation3 + $0x5] sm:$0x1]
    %v57 = vsub.f32 %v55, %v56
    %v58 = vand.u32 2147483647, %v57
    %v59 = vadd.f32 %v50, %v54
    %v60 = vadd.f32 %v59, %v58
    %v61 = vmul.f32 %v60, %v44
    %v62 = vmul.f32 %v41, -50.0
    %v63 = vmax.f32 %v62, 0.0
    %v64 = vmul.f32 %v62, %v42
    %v65 = vsub.f32 %v63, %v64
    %v66 = vand.u32 2147483647, %v62
    %v67 = vsub.f32 0.0, %v66
    %v68 = vmul.f32 %v67, 1.442695
    %v69 = vpow.pop %v68
    %v70 = vadd.f32 %v69, 1.0
    %v71 = vlog2.pop %v70
    %v72 = vmul.f32 %v71, 0.6931472
    %v73 = vadd.f32 %v65, %v72
    %v74 = vmul.f32 %v73, %v46
    %v75 = vld [vmem:[#allocation3 + $0x9] sm:$0x1]
    %v76 = vld [vmem:[#allocation3 + $0xa] sm:$0x1]
    %v77 = vld [vmem:[#allocation3 + $0xb] sm:$0x1]
    %v78 = vmul.f32 %v75, %v75
    %v79 = vmul.f32 %v76, %v76
    %v80 = vadd.f32 %v78, %v79
    %v81 = vmul.f32 %v77, %v77
    %v82 = vadd.f32 %v80, %v81
    %v83 = vrsqrt.pop %v82
    %v84 = vmul.f32 %v83, %v82
    %v85 = vmul.f32 %v84, %v83
    %v86 = vmul.f32 0.5, %v85
    %v87 = vsub.f32 1.5, %v86
    %v88 = vmul.f32 %v83, %v87
    %v89 = vmul.f32 %v82, %v88
    %vm90 = vcmp.eq.f32.partialorder %v82, inf
    %v91 = vsel %vm90, %v82, %v89
    %vm92 = vcmp.eq.f32.partialorder %v82, 0.0
    %v93 = vand.u32 %v82, 2147483648
    %v94 = vsel %vm92, %v93, %v91
    %v95 = vsub.f32 %v94, 1.0
    %v96 = vmul.f32 %v95, %v95
    %v97 = vmul.f32 %v96, %v40
    %v98 = vld [vmem:[#allocation2] sm:$0x1]
    %v99 = vadd.f32 %v98, %v61
    %100 = vst [vmem:[#allocation2] sm:$0x1] %v99
    %v101 = vld [vmem:[#allocation2 + $0x1] sm:$0x1]
    %v102 = vadd.f32 %v101, %v44
    %103 = vst [vmem:[#allocation2 + $0x1] sm:$0x1] %v102
    %v104 = vld [vmem:[#allocation2 + $0x2] sm:$0x1]
    %v105 = vadd.f32 %v104, %v74
    %106 = vst [vmem:[#allocation2 + $0x2] sm:$0x1] %v105
    %v107 = vld [vmem:[#allocation2 + $0x3] sm:$0x1]
    %v108 = vadd.f32 %v107, %v46
    %109 = vst [vmem:[#allocation2 + $0x3] sm:$0x1] %v108
    %v110 = vld [vmem:[#allocation2 + $0x4] sm:$0x1]
    %v111 = vadd.f32 %v110, %v97
    %112 = vst [vmem:[#allocation2 + $0x4] sm:$0x1] %v111
    // Predicated region
    $region14: #{tpu_custom_call.1} parent=1 // pred_check
      %p113 = pneg %p25
    $region15: #{tpu_custom_call.1} parent=1 // pred_check_branch
      %115 = sbr.rel (%p113) target = $region17
    $region16: #{tpu_custom_call.1} parent=1 // pred_region
      %v116 = vld [vmem:[#allocation2] sm:$0x1]
      %vm117 = vcmask 1040384
      %v118 = vsel %vm117, %v116, 0.0
      %119 = vadd.xlane.f32.xlu0 %v118
      %v120 = vpop.xlane.xlu0 %119
      %s121 = vtos %v120
      %v122 = vld [vmem:[#allocation2 + $0x1] sm:$0x1]
      %v123 = vsel %vm117, %v122, 0.0
      %124 = vadd.xlane.f32.xlu0 %v123
      %v125 = vpop.xlane.xlu0 %124
      %s126 = vtos %v125
      %v127 = vld [vmem:[#allocation2 + $0x2] sm:$0x1]
      %v128 = vsel %vm117, %v127, 0.0
      %129 = vadd.xlane.f32.xlu0 %v128
      %v130 = vpop.xlane.xlu0 %129
      %s131 = vtos %v130
      %v132 = vld [vmem:[#allocation2 + $0x3] sm:$0x1]
      %v133 = vsel %vm117, %v132, 0.0
      %134 = vadd.xlane.f32.xlu0 %v133
      %v135 = vpop.xlane.xlu0 %134
      %s136 = vtos %v135
      %v137 = vld [vmem:[#allocation2 + $0x4] sm:$0x1]
      %v138 = vsel %vm117, %v137, 0.0
      %139 = vadd.xlane.f32.xlu0 %v138
      %v140 = vpop.xlane.xlu0 %139
      %s141 = vtos %v140
      %p142 = scmp.gt.f32.partialorder %s126, 0.0
      %s143 = smul.f32 %s126, 3.0
      %s144 = smax.f32 %s143, 1.0
      %v145 = vstv %s144
      %v146 = vrcp.pop %v145
      %v147 = vmul.f32 %v145, %v146
      %v148 = vsub.f32 1.0, %v147
      %v149 = vmul.f32 %v146, %v148
      %v150 = vadd.f32 %v146, %v149
      %vm151 = vweird.f32 %v145
      %vm152 = vweird.f32 %v146
      %vm153 = vmor %vm151, %vm152
      %v154 = vsel %vm153, %v146, %v150
      %v155 = vand.u32 2147483647, %v145
      %vm156 = vcmp.eq.f32.partialorder %v155, 8.507059e+37
      %v157 = vand.u32 %v145, 2147483648
      %v158 = vor.u32 1.1754944e-38, %v157
      %v159 = vsel %vm156, %v158, %v154
      %s160 = vtos %v159
      %s161 = smul.f32 %s121, %s160
      %s162 = smul.f32 %s161, 0.0078125
      %s163 = scalar_select %p142, %s162, 0.0
      %p164 = scmp.gt.f32.partialorder %s136, 0.0
      %s165 = smul.f32 %s131, 0.02
      %s166 = smul.f32 %s165, 0.0078125
      %s167 = scalar_select %p164, %s166, 0.0
      %s168 = smul.f32 %s141, 0.015625
      %s169 = smul.f32 %s168, 0.1
      %s170 = sadd.f32 %s163, %s169
      %s171 = smul.f32 %s167, 100.0
      %s172 = sadd.f32 %s170, %s171
      %s173 = scalar_lea.smem [#allocation6], 0
      %174 = sst [smem:[%s173]] %s172
      %s175 = scalar_lea.smem [#allocation6], 1
      %176 = sst [smem:[%s175]] %s163
      %s177 = scalar_lea.smem [#allocation6], 2
      %178 = sst [smem:[%s177]] %s168
      %s179 = scalar_lea.smem [#allocation6], 3
      %180 = sst [smem:[%s179]] %s167
    $region17: #{tpu_custom_call.1} parent=1 // pred_fallthru
      _
    // Predicated region
    $region18: #{tpu_custom_call.1} parent=1 // pred_check
      _
    $region19: #{tpu_custom_call.1} parent=1 // pred_check_branch
      %182 = sbr.rel (0) target = $region21
    $region20: #{tpu_custom_call.1} parent=1 // pred_region
      %184 = vsyncadd [#allocation5], 0
      %s186 = sshll.u32 %s1, 4
      %s187 = int_to_ptr.hbm [resolvable:$true] %s186
      %189 = dma.smem_to_hbm [#allocation6], 16, %s187, [#allocation5]
    $region21: #{tpu_custom_call.1} parent=1 // pred_fallthru
      _
    // Predicated region
    $region22: #{tpu_custom_call.1} parent=1 // pred_check
      _
    $region23: #{tpu_custom_call.1} parent=1 // pred_check_branch
      %191 = sbr.rel (0) target = $region25
    $region24: #{tpu_custom_call.1} parent=1 // pred_region
      %193 = dma.done [#allocation5], 16
    $region25: #{tpu_custom_call.1} parent=1 // pred_fallthru
      _
    %194 = sfence
    %195 = vsyncpa [#allocation4], 1
    %196 = vsyncpa [#allocation5], 1

</llo_original>
